<compile_context>
chip_gen: v5e
topology: v5e:2x2
jax: 0.10.0
libtpu: 0.0.40
codegen_flags: <defaults>
</compile_context>

<pallas_src>
import math

import jax
import jax.numpy as jnp
from jax.experimental import pallas as pl
from jax.experimental.pallas import tpu as pltpu

NUMBER_OF_NEURONS = 256
_SUBLANE = 8
_MAX_BATCH_TILE = 2048  # rows per grid step upper bound (multiple of 8)


def _round_up(x, m):
    return ((x + m - 1) // m) * m


def _cdiv(a, b):
    return -(-a // b)


def _mlp_kernel(x_ref, w1_ref, b1_ref, w2_ref, b2_ref, w3_ref, b3_ref, out_ref):
    # Layer 1: Linear + ReLU   (bf16 MXU operands, f32 accumulate & elementwise)
    h1 = jnp.dot(x_ref[...], w1_ref[...], preferred_element_type=jnp.float32)
    h1 = jnp.maximum(h1 + b1_ref[...], 0.0)
    # Layer 2: Linear + ReLU
    h2 = jnp.dot(h1.astype(jnp.bfloat16), w2_ref[...],
                 preferred_element_type=jnp.float32)
    h2 = jnp.maximum(h2 + b2_ref[...], 0.0)
    # Layer 3: Linear (Q-values, no activation); narrow (nr_actions-wide) store
    out_ref[...] = (
        jnp.dot(h2.astype(jnp.bfloat16), w3_ref[...],
                preferred_element_type=jnp.float32)
        + b3_ref[...]
    )


def dlq_forward(x, params):
    """Forward pass of DLQModel.

    x: (state_shape,) or (batch, state_shape) float
    params: dict with w1 (S,256) bf16, b1 (1,256) f32, w2 (256,128) bf16,
            b2 (1,128) f32, w3 (128,A) bf16, b3 (1,A) f32
    returns: (batch, nr_actions) float32
    """
    x = jnp.asarray(x, dtype=jnp.float32)
    if x.ndim == 1:
        x = x[None, :]
    elif x.ndim > 2:
        raise ValueError("Input tensor must be 1D or 2D")
    x = x.reshape(x.shape[0], -1)

    w1 = params["w1"].astype(jnp.bfloat16)
    w2 = params["w2"].astype(jnp.bfloat16)
    w3 = params["w3"].astype(jnp.bfloat16)
    b1 = params["b1"].astype(jnp.float32)
    b2 = params["b2"].astype(jnp.float32)
    b3 = params["b3"].astype(jnp.float32)

    batch, state_shape = x.shape
    h1_dim = w1.shape[1]
    h2_dim = w2.shape[1]
    nr_actions = w3.shape[1]

    # ---- balanced batch tiling ------------------------------------------------
    # At least 2 grid steps once batch >= 16 so both v7x TensorCores get work;
    # tiles are roughly equal (rounded up to 8 sublanes) so padding waste stays
    # below 8 rows per tile.
    n_tiles = max(1, _cdiv(batch, _MAX_BATCH_TILE))
    if batch >= 16:
        n_tiles = max(n_tiles, 2)
    tb = _round_up(_cdiv(batch, n_tiles), _SUBLANE)
    padded_batch = n_tiles * tb

    xb = x.astype(jnp.bfloat16)  # halve input DMA; matches in-kernel math
    if padded_batch != batch:
        xb = jnp.pad(xb, ((0, padded_batch - batch), (0, 0)))
    grid = (n_tiles,)

    # Inputs / outputs are tiled over batch; weights & biases are constant-index
    # full blocks (loaded once, VMEM-resident across grid iterations).
    x_spec = pl.BlockSpec((tb, state_shape), lambda i: (i, 0))
    out_spec = pl.BlockSpec((tb, nr_actions), lambda i: (i, 0))
    const = lambda a: pl.BlockSpec(a.shape, lambda i: (0,) * a.ndim)

    flops = 2 * padded_batch * (
        state_shape * h1_dim + h1_dim * h2_dim + h2_dim * nr_actions
    )
    bytes_accessed = (
        xb.size * 2                                   # bf16 activations in
        + (w1.size + w2.size + w3.size) * 2           # bf16 weights, fetched once
        + (b1.size + b2.size + b3.size) * 4           # f32 biases, fetched once
        + padded_batch * nr_actions * 4               # f32 Q-values out
    )

    out = pl.pallas_call(
        _mlp_kernel,
        out_shape=jax.ShapeDtypeStruct((padded_batch, nr_actions), jnp.float32),
        grid=grid,
        in_specs=[x_spec, const(w1), const(b1), const(w2), const(b2),
                  const(w3), const(b3)],
        out_specs=out_spec,
        compiler_params=pltpu.CompilerParams(
            dimension_semantics=("parallel",),
            vmem_limit_bytes=16 * 1024 * 1024,
        ),
        cost_estimate=pl.CostEstimate(
            flops=flops, transcendentals=0, bytes_accessed=bytes_accessed
        ),
    )(xb, w1, b1, w2, b2, w3, b3)

    return out[:batch]


def init_params(state_shape, nr_actions, key):
    """Deterministic synthetic parameter init (shapes match nn.Linear layers)."""
    k1, k2, k3, k4, k5, k6 = jax.random.split(key, 6)
    h1 = NUMBER_OF_NEURONS
    h2 = NUMBER_OF_NEURONS // 2

    def uniform(k, shape, fan_in, dtype):
        bound = 1.0 / math.sqrt(float(fan_in))
        return jax.random.uniform(k, shape, jnp.float32, -bound, bound).astype(dtype)

    # Weights stored (in, out) == transpose of torch's (out, in), bf16 for the MXU;
    # biases as (1, out) f32 for VPU-side bias add.
    return {
        "w1": uniform(k1, (state_shape, h1), state_shape, jnp.bfloat16),
        "b1": uniform(k2, (1, h1), state_shape, jnp.float32),
        "w2": uniform(k3, (h1, h2), h1, jnp.bfloat16),
        "b2": uniform(k4, (1, h2), h1, jnp.float32),
        "w3": uniform(k5, (h2, nr_actions), h2, jnp.bfloat16),
        "b3": uniform(k6, (1, nr_actions), h2, jnp.float32),
    }


def _reference_forward(x, params):
    """Pure-JAX reference with the same bf16-operand / f32-accumulate math."""
    x = jnp.asarray(x, jnp.float32)
    if x.ndim == 1:
        x = x[None, :]
    h1 = jnp.dot(x.astype(jnp.bfloat16), params["w1"].astype(jnp.bfloat16),
                 preferred_element_type=jnp.float32) + params["b1"]
    h1 = jnp.maximum(h1, 0.0)
    h2 = jnp.dot(h1.astype(jnp.bfloat16), params["w2"].astype(jnp.bfloat16),
                 preferred_element_type=jnp.float32) + params["b2"]
    h2 = jnp.maximum(h2, 0.0)
    return jnp.dot(h2.astype(jnp.bfloat16), params["w3"].astype(jnp.bfloat16),
                   preferred_element_type=jnp.float32) + params["b3"]


if __name__ == "__main__":
    state_shape = 16   # size of the game-state feature vector
    nr_actions = 4     # snake actions: up/down/left/right
    batch = 2

    key = jax.random.PRNGKey(0)
    kx, kp = jax.random.split(key)

    params = init_params(state_shape, nr_actions, kp)
    x = jax.random.normal(kx, (batch, state_shape), dtype=jnp.float32)

    q_values = dlq_forward(x, params)
    q_values = jax.block_until_ready(q_values)

    # sanity-check against a pure-JAX reference of the same math
    ref = _reference_forward(x, params)
    assert q_values.shape == (batch, nr_actions)
    assert jnp.allclose(q_values, ref, atol=2e-3, rtol=2e-3), (
        jnp.max(jnp.abs(q_values - ref))
    )

    # also exercise a batch large enough to use multiple grid steps (2 tiles here)
    xb = jax.random.normal(kx, (1000, state_shape), dtype=jnp.float32)
    qb = jax.block_until_ready(dlq_forward(xb, params))
    refb = _reference_forward(xb, params)
    assert qb.shape == (1000, nr_actions)
    assert jnp.allclose(qb, refb, atol=2e-3, rtol=2e-3)

    # 1-D input path (unsqueeze to batch of 1), as in the torch forward
    q1 = jax.block_until_ready(dlq_forward(x[0], params))
    assert q1.shape == (1, nr_actions)
    assert jnp.allclose(q1, ref[:1], atol=2e-3, rtol=2e-3)

    print("KERNEL_OK")
</pallas_src>

<mosaic_0001>
module attributes {stable_mosaic.version = 11 : i64} {
  func.func @_mlp_kernel(%arg0: i32, %arg1: memref<8x16xbf16, #tpu.memory_space<vmem>>, %arg2: memref<16x256xbf16, #tpu.memory_space<vmem>>, %arg3: memref<1x256xf32, #tpu.memory_space<vmem>>, %arg4: memref<256x128xbf16, #tpu.memory_space<vmem>>, %arg5: memref<1x128xf32, #tpu.memory_space<vmem>>, %arg6: memref<128x4xbf16, #tpu.memory_space<vmem>>, %arg7: memref<1x4xf32, #tpu.memory_space<vmem>>, %arg8: memref<8x4xf32, #tpu.memory_space<vmem>>) attributes {dimension_semantics = [#tpu.dimension_semantics<parallel>], iteration_bounds = array<i64: 1>, scalar_prefetch = 0 : i64, scratch_operands = 0 : i64, tpu.core_type = #tpu.core_type<tc>, window_params = [{transform_indices = @transform_0, window_bounds = array<i64: 8, 16>}, {pipeline_mode = #tpu.pipeline_mode<synchronous>, transform_indices = @transform_1, window_bounds = array<i64: 16, 256>}, {pipeline_mode = #tpu.pipeline_mode<synchronous>, transform_indices = @transform_2, window_bounds = array<i64: 1, 256>}, {pipeline_mode = #tpu.pipeline_mode<synchronous>, transform_indices = @transform_3, window_bounds = array<i64: 256, 128>}, {pipeline_mode = #tpu.pipeline_mode<synchronous>, transform_indices = @transform_4, window_bounds = array<i64: 1, 128>}, {pipeline_mode = #tpu.pipeline_mode<synchronous>, transform_indices = @transform_5, window_bounds = array<i64: 128, 4>}, {pipeline_mode = #tpu.pipeline_mode<synchronous>, transform_indices = @transform_6, window_bounds = array<i64: 1, 4>}, {transform_indices = @transform_7, window_bounds = array<i64: 8, 4>}]} {
    %c0 = arith.constant 0 : index
    %c0_0 = arith.constant 0 : index
    %0 = vector.load %arg1[%c0, %c0_0] : memref<8x16xbf16, #tpu.memory_space<vmem>>, vector<8x16xbf16>
    %c0_1 = arith.constant 0 : index
    %c0_2 = arith.constant 0 : index
    %1 = vector.load %arg2[%c0_1, %c0_2] : memref<16x256xbf16, #tpu.memory_space<vmem>>, vector<16x256xbf16>
    %cst = arith.constant dense<0.000000e+00> : vector<8x256xf32>
    %2 = tpu.matmul %0, %1, %cst {dimension_numbers = #tpu.dot_dimension_numbers<[1], [0], [0], [1], [0, 0, 1, 1], [], []>} : vector<8x16xbf16>, vector<16x256xbf16>, vector<8x256xf32> -> vector<8x256xf32>
    %c0_3 = arith.constant 0 : index
    %c0_4 = arith.constant 0 : index
    %3 = vector.load %arg3[%c0_3, %c0_4] : memref<1x256xf32, #tpu.memory_space<vmem>>, vector<1x256xf32>
    %4 = vector.broadcast %3 : vector<1x256xf32> to vector<8x256xf32>
    %5 = arith.addf %2, %4 : vector<8x256xf32>
    %cst_5 = arith.constant 0.000000e+00 : f32
    %6 = vector.broadcast %cst_5 : f32 to vector<8x256xf32>
    %7 = arith.maximumf %5, %6 : vector<8x256xf32>
    %8 = arith.truncf %7 : vector<8x256xf32> to vector<8x256xbf16>
    %c0_6 = arith.constant 0 : index
    %c0_7 = arith.constant 0 : index
    %9 = vector.load %arg4[%c0_6, %c0_7] : memref<256x128xbf16, #tpu.memory_space<vmem>>, vector<256x128xbf16>
    %cst_8 = arith.constant dense<0.000000e+00> : vector<8x128xf32>
    %10 = tpu.matmul %8, %9, %cst_8 {dimension_numbers = #tpu.dot_dimension_numbers<[1], [0], [0], [1], [0, 0, 1, 1], [], []>} : vector<8x256xbf16>, vector<256x128xbf16>, vector<8x128xf32> -> vector<8x128xf32>
    %c0_9 = arith.constant 0 : index
    %c0_10 = arith.constant 0 : index
    %11 = vector.load %arg5[%c0_9, %c0_10] : memref<1x128xf32, #tpu.memory_space<vmem>>, vector<1x128xf32>
    %12 = vector.broadcast %11 : vector<1x128xf32> to vector<8x128xf32>
    %13 = arith.addf %10, %12 : vector<8x128xf32>
    %cst_11 = arith.constant 0.000000e+00 : f32
    %14 = vector.broadcast %cst_11 : f32 to vector<8x128xf32>
    %15 = arith.maximumf %13, %14 : vector<8x128xf32>
    %16 = arith.truncf %15 : vector<8x128xf32> to vector<8x128xbf16>
    %c0_12 = arith.constant 0 : index
    %c0_13 = arith.constant 0 : index
    %17 = vector.load %arg6[%c0_12, %c0_13] : memref<128x4xbf16, #tpu.memory_space<vmem>>, vector<128x4xbf16>
    %cst_14 = arith.constant dense<0.000000e+00> : vector<8x4xf32>
    %18 = tpu.matmul %16, %17, %cst_14 {dimension_numbers = #tpu.dot_dimension_numbers<[1], [0], [0], [1], [0, 0, 1, 1], [], []>} : vector<8x128xbf16>, vector<128x4xbf16>, vector<8x4xf32> -> vector<8x4xf32>
    %c0_15 = arith.constant 0 : index
    %c0_16 = arith.constant 0 : index
    %19 = vector.load %arg7[%c0_15, %c0_16] : memref<1x4xf32, #tpu.memory_space<vmem>>, vector<1x4xf32>
    %20 = vector.broadcast %19 : vector<1x4xf32> to vector<8x4xf32>
    %21 = arith.addf %18, %20 : vector<8x4xf32>
    %c0_17 = arith.constant 0 : index
    %c0_18 = arith.constant 0 : index
    %22 = vector.load %arg8[%c0_17, %c0_18] : memref<8x4xf32, #tpu.memory_space<vmem>>, vector<8x4xf32>
    tpu.vector_store %arg8[%c0_17, %c0_18], %21 {strides = array<i32>} : memref<8x4xf32, #tpu.memory_space<vmem>>, vector<8x4xf32>,
    return
  }
  func.func @transform_0(%arg0: i32) -> (i32, i32) {
    %c0_i32 = arith.constant 0 : i32
    %c0_i32_0 = arith.constant 0 : i32
    return %arg0, %c0_i32 : i32, i32
  }
  func.func @transform_1(%arg0: i32) -> (i32, i32) {
    %c0_i32 = arith.constant 0 : i32
    %c0_i32_0 = arith.constant 0 : i32
    %c0_i32_1 = arith.constant 0 : i32
    return %c0_i32, %c0_i32_0 : i32, i32
  }
  func.func @transform_2(%arg0: i32) -> (i32, i32) {
    %c0_i32 = arith.constant 0 : i32
    %c0_i32_0 = arith.constant 0 : i32
    %c0_i32_1 = arith.constant 0 : i32
    return %c0_i32, %c0_i32_0 : i32, i32
  }
  func.func @transform_3(%arg0: i32) -> (i32, i32) {
    %c0_i32 = arith.constant 0 : i32
    %c0_i32_0 = arith.constant 0 : i32
    %c0_i32_1 = arith.constant 0 : i32
    return %c0_i32, %c0_i32_0 : i32, i32
  }
  func.func @transform_4(%arg0: i32) -> (i32, i32) {
    %c0_i32 = arith.constant 0 : i32
    %c0_i32_0 = arith.constant 0 : i32
    %c0_i32_1 = arith.constant 0 : i32
    return %c0_i32, %c0_i32_0 : i32, i32
  }
  func.func @transform_5(%arg0: i32) -> (i32, i32) {
    %c0_i32 = arith.constant 0 : i32
    %c0_i32_0 = arith.constant 0 : i32
    %c0_i32_1 = arith.constant 0 : i32
    return %c0_i32, %c0_i32_0 : i32, i32
  }
  func.func @transform_6(%arg0: i32) -> (i32, i32) {
    %c0_i32 = arith.constant 0 : i32
    %c0_i32_0 = arith.constant 0 : i32
    %c0_i32_1 = arith.constant 0 : i32
    return %c0_i32, %c0_i32_0 : i32, i32
  }
  func.func @transform_7(%arg0: i32) -> (i32, i32) {
    %c0_i32 = arith.constant 0 : i32
    %c0_i32_0 = arith.constant 0 : i32
    return %arg0, %c0_i32 : i32, i32
  }
}

</mosaic_0001>

<llo_original>
// kernel: tpu_custom_call.1
$region0: #{tpu_custom_call.1}
  #allocation0 [shape = 'u32[]', space=smem, size = 0x4, offset = 0x4, fixed_abs, tag = 'smem constant byte address 0x4 - core index']
  #allocation1 [shape = 'u32[72,128]{1,0:T(1,128)}', space=vmem, size = 0x9000, scoped, tag = 'internal scratch']
  %s0 = inlined_call_operand.vmem [shape: bf16[8,16], index: 0, kind: input, shape index: {}]
  %s1 = inlined_call_operand.vmem [shape: bf16[16,256], index: 1, kind: input, shape index: {}]
  %s2 = inlined_call_operand.vmem [shape: f32[1,256], index: 2, kind: input, shape index: {}]
  %s3 = inlined_call_operand.hbm [shape: bf16[256,128], index: 3, kind: input, shape index: {}]
  %s4 = inlined_call_operand.vmem [shape: f32[1,128], index: 4, kind: input, shape index: {}]
  %s5 = inlined_call_operand.vmem [shape: bf16[128,4], index: 5, kind: input, shape index: {}]
  %s6 = inlined_call_operand.vmem [shape: f32[1,4], index: 6, kind: input, shape index: {}]
  %s7 = inlined_call_operand.vmem [shape: f32[8,4], index: 7, kind: output, shape index: {}]
  %s8 = sld [smem:[#allocation0]]
  $region42: #{tpu_custom_call.1} parent=0
    _
  %s10 = ssub.s32 1, %s8
  %s11 = scalar_select 0, %s10, %s8
  $region1: #{tpu_custom_call.1} parent=0
    #allocation2 [shape = 'u8[65536]{0}', space=vmem, size = 0x10000, scoped, tag = 'input window, operand 3, single buffered']
    #allocation3 [shape = 's32[1]{0}', space=sflag, size = 0x4, scoped, tag = 'scoped memory for tpu_custom_call.1']
    %12 = vsyncpa [#allocation3], 0
    // Predicated region
    $region2: #{tpu_custom_call.1} parent=1 // pred_check
      _
    $region3: #{tpu_custom_call.1} parent=1 // pred_check_branch
      %14 = sbr.rel (0) target = $region5
    $region4: #{tpu_custom_call.1} parent=1 // pred_region
      _
    $region5: #{tpu_custom_call.1} parent=1 // pred_fallthru
      _
    // Predicated region
    $region6: #{tpu_custom_call.1} parent=1 // pred_check
      _
    $region7: #{tpu_custom_call.1} parent=1 // pred_check_branch
      %16 = sbr.rel (0) target = $region9
    $region8: #{tpu_custom_call.1} parent=1 // pred_region
      _
    $region9: #{tpu_custom_call.1} parent=1 // pred_fallthru
      _
    // Predicated region
    $region10: #{tpu_custom_call.1} parent=1 // pred_check
      _
    $region11: #{tpu_custom_call.1} parent=1 // pred_check_branch
      %18 = sbr.rel (0) target = $region13
    $region12: #{tpu_custom_call.1} parent=1 // pred_region
      _
    $region13: #{tpu_custom_call.1} parent=1 // pred_fallthru
      _
    // Predicated region
    $region14: #{tpu_custom_call.1} parent=1 // pred_check
      _
    $region15: #{tpu_custom_call.1} parent=1 // pred_check_branch
      %20 = sbr.rel (0) target = $region17
    $region16: #{tpu_custom_call.1} parent=1 // pred_region
      %22 = vsyncadd [#allocation3], 0
      %s23 = sshll.u32 %s3, 4
      %s24 = int_to_ptr.hbm [resolvable:$true] %s23
      %s25 = sshll.u32 [#allocation2], 4
      %s26 = int_to_ptr.vmem [resolvable:$true] %s25
      %31 = dma.hbm_to_vmem [thread:$0]  %s24, 2048, %s26, [#allocation3], 64, 64, 4
    $region17: #{tpu_custom_call.1} parent=1 // pred_fallthru
      _
    // Predicated region
    $region18: #{tpu_custom_call.1} parent=1 // pred_check
      _
    $region19: #{tpu_custom_call.1} parent=1 // pred_check_branch
      %33 = sbr.rel (0) target = $region21
    $region20: #{tpu_custom_call.1} parent=1 // pred_region
      _
    $region21: #{tpu_custom_call.1} parent=1 // pred_fallthru
      _
    // Predicated region
    $region22: #{tpu_custom_call.1} parent=1 // pred_check
      _
    $region23: #{tpu_custom_call.1} parent=1 // pred_check_branch
      %35 = sbr.rel (0) target = $region25
    $region24: #{tpu_custom_call.1} parent=1 // pred_region
      _
    $region25: #{tpu_custom_call.1} parent=1 // pred_fallthru
      _
    // Predicated region
    $region26: #{tpu_custom_call.1} parent=1 // pred_check
      _
    $region27: #{tpu_custom_call.1} parent=1 // pred_check_branch
      %37 = sbr.rel (0) target = $region29
    $region28: #{tpu_custom_call.1} parent=1 // pred_region
      _
    $region29: #{tpu_custom_call.1} parent=1 // pred_fallthru
      _
    // Predicated region
    $region30: #{tpu_custom_call.1} parent=1 // pred_check
      _
    $region31: #{tpu_custom_call.1} parent=1 // pred_check_branch
      %39 = sbr.rel (0) target = $region33
    $region32: #{tpu_custom_call.1} parent=1 // pred_region
      %41 = dma.done [#allocation3], 2048
    $region33: #{tpu_custom_call.1} parent=1 // pred_fallthru
      _
    %v43 = vld [vmem:[%s0] sm:$0xf]
    %v44 = vld [vmem:[%s1] sm:$0xff]
    %v45 = vld [vmem:[%s1 + $0x8] sm:$0xff]
    %v46 = vld [vmem:[%s2] sm:$0x3]
    %v48 = vperm.slane %v46, 0
    %v49 = vperm.slane %v46, 1
    %v54 = vunpack.c.l.b16 %v44
    %v55 = vunpack.c.h.b16 %v44
    %v56 = vunpack.c.l.b16 %v45
    %v57 = vunpack.c.h.b16 %v45
    %v58 = vpack.c.b16 %v56, %v54
    %v59 = vpack.c.b16 %v57, %v55
    %vm62 = vcmask 130048
    %v64 = vsel %vm62, %v43, 0
    %66 = vmatpush.bf16.msra.mxu0 0
    %67 = vmatpush.bf16.msra.mxu0 0
    %68 = vmatpush.bf16.msra.mxu0 0
    %69 = vmatpush.bf16.msra.mxu0 0
    %70 = vmatpush.bf16.msra.mxu0 0
    %71 = vmatpush.bf16.msra.mxu0 0
    %72 = vmatpush.bf16.msra.mxu0 0
    %73 = vmatpush.bf16.msra.mxu0 %v58
    %74 = vmatmul.bf16.gmra.mxu0 %v64
    %v75 = vpop.f32.mrf.mxu0
    %v76 = vadd.f32 %v48, %v75
    %v77 = vpop.f32.mrf.mxu0
    %78 = vdwg.mxu0
    %79 = vmatpush.bf16.msra.mxu0 0
    %80 = vmatpush.bf16.msra.mxu0 0
    %81 = vmatpush.bf16.msra.mxu0 0
    %82 = vmatpush.bf16.msra.mxu0 0
    %83 = vmatpush.bf16.msra.mxu0 0
    %84 = vmatpush.bf16.msra.mxu0 0
    %85 = vmatpush.bf16.msra.mxu0 0
    %86 = vmatpush.bf16.msra.mxu0 %v59
    %87 = vmatmul.bf16.gmra.mxu0 %v64
    %v88 = vpop.f32.mrf.mxu0
    %v89 = vadd.f32 %v49, %v88
    %v90 = vpop.f32.mrf.mxu0
    %91 = vdwg.mxu0
    %v92 = vmax.f32 %v76, 0.0
    %v93 = vmax.f32 %v89, 0.0
    %v94 = vpack.c.bf16 %v92, %v92
    %v95 = vpack.c.bf16 %v93, %v93
    %v96 = vld [vmem:[#allocation2] sm:$0xf]
    %v97 = vld [vmem:[#allocation2 + $0x4] sm:$0xf]
    %v98 = vld [vmem:[#allocation2 + $0x8] sm:$0xf]
    %v99 = vld [vmem:[#allocation2 + $0xc] sm:$0xf]
    %v100 = vld [vmem:[#allocation2 + $0x10] sm:$0xf]
    %v101 = vld [vmem:[#allocation2 + $0x14] sm:$0xf]
    %v102 = vld [vmem:[#allocation2 + $0x18] sm:$0xf]
    %v103 = vld [vmem:[#allocation2 + $0x1c] sm:$0xf]
    %v104 = vld [vmem:[#allocation2 + $0x20] sm:$0xf]
    %v105 = vld [vmem:[#allocation2 + $0x24] sm:$0xf]
    %v106 = vld [vmem:[#allocation2 + $0x28] sm:$0xf]
    %v107 = vld [vmem:[#allocation2 + $0x2c] sm:$0xf]
    %v108 = vld [vmem:[#allocation2 + $0x30] sm:$0xf]
    %v109 = vld [vmem:[#allocation2 + $0x34] sm:$0xf]
    %v110 = vld [vmem:[#allocation2 + $0x38] sm:$0xf]
    %v111 = vld [vmem:[#allocation2 + $0x3c] sm:$0xf]
    %v112 = vld [vmem:[#allocation2 + $0x40] sm:$0xf]
    %v113 = vld [vmem:[#allocation2 + $0x44] sm:$0xf]
    %v114 = vld [vmem:[#allocation2 + $0x48] sm:$0xf]
    %v115 = vld [vmem:[#allocation2 + $0x4c] sm:$0xf]
    %v116 = vld [vmem:[#allocation2 + $0x50] sm:$0xf]
    %v117 = vld [vmem:[#allocation2 + $0x54] sm:$0xf]
    %v118 = vld [vmem:[#allocation2 + $0x58] sm:$0xf]
    %v119 = vld [vmem:[#allocation2 + $0x5c] sm:$0xf]
    %v120 = vld [vmem:[#allocation2 + $0x60] sm:$0xf]
    %v121 = vld [vmem:[#allocation2 + $0x64] sm:$0xf]
    %v122 = vld [vmem:[#allocation2 + $0x68] sm:$0xf]
    %v123 = vld [vmem:[#allocation2 + $0x6c] sm:$0xf]
    %v124 = vld [vmem:[#allocation2 + $0x70] sm:$0xf]
    %v125 = vld [vmem:[#allocation2 + $0x74] sm:$0xf]
    %v126 = vld [vmem:[#allocation2 + $0x78] sm:$0xf]
    %v127 = vld [vmem:[#allocation2 + $0x7c] sm:$0xf]
    %v128 = vld [vmem:[%s4] sm:$0x1]
    %v130 = vperm.slane %v128, 0
    %v164 = vunpack.c.l.b16 %v96
    %v165 = vunpack.c.l.b16 %v97
    %v166 = vunpack.c.l.b16 %v98
    %v167 = vunpack.c.l.b16 %v99
    %v168 = vunpack.c.l.b16 %v100
    %v169 = vunpack.c.l.b16 %v101
    %v170 = vunpack.c.l.b16 %v102
    %v171 = vunpack.c.l.b16 %v103
    %v172 = vunpack.c.l.b16 %v104
    %v173 = vunpack.c.l.b16 %v105
    %v174 = vunpack.c.l.b16 %v106
    %v175 = vunpack.c.l.b16 %v107
    %v176 = vunpack.c.l.b16 %v108
    %v177 = vunpack.c.l.b16 %v109
    %v178 = vunpack.c.l.b16 %v110
    %v179 = vunpack.c.l.b16 %v111
    %v180 = vunpack.c.l.b16 %v112
    %v181 = vunpack.c.l.b16 %v113
    %v182 = vunpack.c.l.b16 %v114
    %v183 = vunpack.c.l.b16 %v115
    %v184 = vunpack.c.l.b16 %v116
    %v185 = vunpack.c.l.b16 %v117
    %v186 = vunpack.c.l.b16 %v118
    %v187 = vunpack.c.l.b16 %v119
    %v188 = vunpack.c.l.b16 %v120
    %v189 = vunpack.c.l.b16 %v121
    %v190 = vunpack.c.l.b16 %v122
    %v191 = vunpack.c.l.b16 %v123
    %v192 = vunpack.c.l.b16 %v124
    %v193 = vunpack.c.l.b16 %v125
    %v194 = vunpack.c.l.b16 %v126
    %v195 = vunpack.c.l.b16 %v127
    %v196 = vpack.c.b16 %v165, %v164
    %v197 = vpack.c.b16 %v167, %v166
    %v198 = vpack.c.b16 %v169, %v168
    %v199 = vpack.c.b16 %v171, %v170
    %v200 = vpack.c.b16 %v173, %v172
    %v201 = vpack.c.b16 %v175, %v174
    %v202 = vpack.c.b16 %v177, %v176
    %v203 = vpack.c.b16 %v179, %v178
    %v204 = vpack.c.b16 %v181, %v180
    %v205 = vpack.c.b16 %v183, %v182
    %v206 = vpack.c.b16 %v185, %v184
    %v207 = vpack.c.b16 %v187, %v186
    %v208 = vpack.c.b16 %v189, %v188
    %v209 = vpack.c.b16 %v191, %v190
    %v210 = vpack.c.b16 %v193, %v192
    %v211 = vpack.c.b16 %v195, %v194
    %228 = vmatpush.bf16.msra.mxu0 %v203
    %229 = vmatpush.bf16.msra.mxu0 %v202
    %230 = vmatpush.bf16.msra.mxu0 %v201
    %231 = vmatpush.bf16.msra.mxu0 %v200
    %232 = vmatpush.bf16.msra.mxu0 %v199
    %233 = vmatpush.bf16.msra.mxu0 %v198
    %234 = vmatpush.bf16.msra.mxu0 %v197
    %235 = vmatpush.bf16.msra.mxu0 %v196
    %236 = vmatmul.bf16.gmra.mxu0 %v94
    %v237 = vpop.f32.mrf.mxu0
    %v238 = vadd.f32 %v130, %v237
    %v239 = vpop.f32.mrf.mxu0
    %240 = vdwg.mxu0
    %241 = vmatpush.bf16.msra.mxu0 %v211
    %242 = vmatpush.bf16.msra.mxu0 %v210
    %243 = vmatpush.bf16.msra.mxu0 %v209
    %244 = vmatpush.bf16.msra.mxu0 %v208
    %245 = vmatpush.bf16.msra.mxu0 %v207
    %246 = vmatpush.bf16.msra.mxu0 %v206
    %247 = vmatpush.bf16.msra.mxu0 %v205
    %248 = vmatpush.bf16.msra.mxu0 %v204
    %249 = vmatmul.bf16.gmra.mxu0 %v95
    %v250 = vpop.f32.mrf.mxu0
    %v251 = vadd.f32 %v238, %v250
    %v252 = vpop.f32.mrf.mxu0
    %253 = vdwg.mxu0
    %v254 = vmax.f32 %v251, 0.0
    %v255 = vpack.c.bf16 %v254, %v254
    %v256 = vld [vmem:[%s5] sm:$0xf]
    %v257 = vld [vmem:[%s5 + $0x4] sm:$0xf]
    %v258 = vld [vmem:[%s5 + $0x8] sm:$0xf]
    %v259 = vld [vmem:[%s5 + $0xc] sm:$0xf]
    %v260 = vld [vmem:[%s5 + $0x10] sm:$0xf]
    %v261 = vld [vmem:[%s5 + $0x14] sm:$0xf]
    %v262 = vld [vmem:[%s5 + $0x18] sm:$0xf]
    %v263 = vld [vmem:[%s5 + $0x1c] sm:$0xf]
    %v264 = vld [vmem:[%s5 + $0x20] sm:$0xf]
    %v265 = vld [vmem:[%s5 + $0x24] sm:$0xf]
    %v266 = vld [vmem:[%s5 + $0x28] sm:$0xf]
    %v267 = vld [vmem:[%s5 + $0x2c] sm:$0xf]
    %v268 = vld [vmem:[%s5 + $0x30] sm:$0xf]
    %v269 = vld [vmem:[%s5 + $0x34] sm:$0xf]
    %v270 = vld [vmem:[%s5 + $0x38] sm:$0xf]
    %v271 = vld [vmem:[%s5 + $0x3c] sm:$0xf]
    %v272 = vld [vmem:[%s6] sm:$0x1]
    %v274 = vperm.slane %v272, 0
    %v292 = vunpack.c.l.b16 %v256
    %v293 = vunpack.c.l.b16 %v257
    %v294 = vunpack.c.l.b16 %v258
    %v295 = vunpack.c.l.b16 %v259
    %v296 = vunpack.c.l.b16 %v260
    %v297 = vunpack.c.l.b16 %v261
    %v298 = vunpack.c.l.b16 %v262
    %v299 = vunpack.c.l.b16 %v263
    %v300 = vunpack.c.l.b16 %v264
    %v301 = vunpack.c.l.b16 %v265
    %v302 = vunpack.c.l.b16 %v266
    %v303 = vunpack.c.l.b16 %v267
    %v304 = vunpack.c.l.b16 %v268
    %v305 = vunpack.c.l.b16 %v269
    %v306 = vunpack.c.l.b16 %v270
    %v307 = vunpack.c.l.b16 %v271
    %v308 = vpack.c.b16 %v293, %v292
    %v309 = vpack.c.b16 %v295, %v294
    %v310 = vpack.c.b16 %v297, %v296
    %v311 = vpack.c.b16 %v299, %v298
    %v312 = vpack.c.b16 %v301, %v300
    %v313 = vpack.c.b16 %v303, %v302
    %v314 = vpack.c.b16 %v305, %v304
    %v315 = vpack.c.b16 %v307, %v306
    %324 = vmatpush.bf16.msra.mxu0 %v315
    %325 = vmatpush.bf16.msra.mxu0 %v314
    %326 = vmatpush.bf16.msra.mxu0 %v313
    %327 = vmatpush.bf16.msra.mxu0 %v312
    %328 = vmatpush.bf16.msra.mxu0 %v311
    %329 = vmatpush.bf16.msra.mxu0 %v310
    %330 = vmatpush.bf16.msra.mxu0 %v309
    %331 = vmatpush.bf16.msra.mxu0 %v308
    %332 = vmatmul.bf16.gmra.mxu0 %v255
    %v333 = vpop.f32.mrf.mxu0
    %v334 = vadd.f32 %v274, %v333
    %v335 = vpop.f32.mrf.mxu0
    %336 = vdwg.mxu0
    %vm337 = vcmask 31744
    %338 = vst.msk [vmem:[%s7] sm:$0xff] %vm337, %v334
    // Predicated region
    $region34: #{tpu_custom_call.1} parent=1 // pred_check
      _
    $region35: #{tpu_custom_call.1} parent=1 // pred_check_branch
      %340 = sbr.rel (0) target = $region37
    $region36: #{tpu_custom_call.1} parent=1 // pred_region
      _
    $region37: #{tpu_custom_call.1} parent=1 // pred_fallthru
      _
    // Predicated region
    $region38: #{tpu_custom_call.1} parent=1 // pred_check
      _
    $region39: #{tpu_custom_call.1} parent=1 // pred_check_branch
      %342 = sbr.rel (0) target = $region41
    $region40: #{tpu_custom_call.1} parent=1 // pred_region
      _
    $region41: #{tpu_custom_call.1} parent=1 // pred_fallthru
      _
    %343 = vsyncpa [#allocation3], 1

</llo_original>
